<compile_context>
chip_gen: v5e
topology: v5e:2x2
jax: 0.10.0
libtpu: 0.0.40
codegen_flags: <defaults>
</compile_context>

<pallas_src>
import jax
import jax.numpy as jnp
import numpy as np
from jax.experimental import pallas as pl
from jax.experimental.pallas import tpu as pltpu

# Model / problem sizes (in_chan=3 -> W=32 in the PyTorch module, 64 conv filters,
# fc: 64*32*32 -> 10).
B = 2
CIN = 3
H = W = 32
COUT = 64
KH = KW = 3
NUM_CLASSES = 10
FC_IN = COUT * H * W          # 65536
BN_EPS = 1e-5

KTAP = KH * KW * CIN          # 27 im2col taps
KPAD = 32                     # 27 taps + 1 bias row + 4 zero-pad rows (sublane mult of 8)
TK = 8192                     # FC reduction tile (FC_IN // TK = 8 grid steps)


# ---------------------------------------------------------------------------
# Kernels
# ---------------------------------------------------------------------------
def conv_bn_relu_kernel(p_ref, w_ref, o_ref):
    """Per-image fused im2col conv + BN(eval) + ReLU.

    p_ref: [1, KPAD, H*W]  im2col patches (row KTAP is all-ones -> bias/shift)
    w_ref: [COUT, KPAD]    BN-folded conv weights (col KTAP holds the BN shift)
    o_ref: [1, COUT, H*W]  channel-major, lane-dense output
    """
    acc = jnp.dot(w_ref[...], p_ref[0], preferred_element_type=jnp.float32)
    o_ref[0] = jnp.maximum(acc, 0.0)


def fc_kernel(x_ref, w_ref, b_ref, o_ref, acc_ref):
    """K-tiled final linear layer.

    x_ref:   [B, TK]            f32 activation slice
    w_ref:   [NUM_CLASSES, TK]  bf16 weight slice (lane-dense)
    b_ref:   [1, NUM_CLASSES]   bias
    o_ref:   [B, NUM_CLASSES]   output
    acc_ref: [B, NUM_CLASSES]   f32 accumulator scratch
    """
    k = pl.program_id(0)

    @pl.when(k == 0)
    def _():
        acc_ref[...] = jnp.zeros_like(acc_ref)

    acc_ref[...] += jax.lax.dot_general(
        x_ref[...].astype(jnp.bfloat16), w_ref[...],
        dimension_numbers=(((1,), (1,)), ((), ())),
        preferred_element_type=jnp.float32)

    @pl.when(k == pl.num_programs(0) - 1)
    def _():
        o_ref[...] = acc_ref[...] + b_ref[...]


# ---------------------------------------------------------------------------
# Wrappers
# ---------------------------------------------------------------------------
def build_patches(x_nchw):
    """im2col in the wrapper: [B, KPAD, H*W], tap order (kh, kw, ci), bias row at KTAP."""
    x_nhwc = jnp.transpose(x_nchw, (0, 2, 3, 1))
    x_pad = jnp.pad(x_nhwc, ((0, 0), (1, 1), (1, 1), (0, 0)))
    cols = []
    for kh in range(KH):
        for kw in range(KW):
            sl = x_pad[:, kh:kh + H, kw:kw + W, :]                       # [B,H,W,CIN]
            cols.append(jnp.transpose(sl, (0, 3, 1, 2)).reshape(B, CIN, H * W))
    p = jnp.concatenate(cols, axis=1)                                    # [B, 27, H*W]
    ones = jnp.ones((B, 1, H * W), jnp.float32)                          # bias row
    zeros = jnp.zeros((B, KPAD - KTAP - 1, H * W), jnp.float32)
    return jnp.concatenate([p, ones, zeros], axis=1)                     # [B, 32, H*W]


def pack_conv_weights(conv_w_hwio, scale, shift):
    """BN-folded, channel-major conv weights [COUT, KPAD]; col KTAP = BN shift."""
    w = conv_w_hwio * scale[None, None, None, :]                         # fold gamma/sqrt(var)
    w_t = jnp.transpose(w, (3, 0, 1, 2)).reshape(COUT, KTAP)             # (kh, kw, ci) order
    return jnp.concatenate(
        [w_t, shift[:, None], jnp.zeros((COUT, KPAD - KTAP - 1), jnp.float32)],
        axis=1)                                                          # [COUT, 32]


def conv_bn_relu(patches, w_packed):
    return pl.pallas_call(
        conv_bn_relu_kernel,
        out_shape=jax.ShapeDtypeStruct((B, COUT, H * W), jnp.float32),
        grid=(B,),
        in_specs=[
            pl.BlockSpec((1, KPAD, H * W), lambda b: (b, 0, 0)),
            pl.BlockSpec((COUT, KPAD), lambda b: (0, 0)),
        ],
        out_specs=pl.BlockSpec((1, COUT, H * W), lambda b: (b, 0, 0)),
        compiler_params=pltpu.CompilerParams(
            dimension_semantics=("parallel",)),
    )(patches, w_packed)                                                 # [B, COUT, H*W]


def fc(x_flat, w_t_bf16, bias):
    return pl.pallas_call(
        fc_kernel,
        out_shape=jax.ShapeDtypeStruct((B, NUM_CLASSES), jnp.float32),
        grid=(FC_IN // TK,),
        in_specs=[
            pl.BlockSpec((B, TK), lambda k: (0, k)),
            pl.BlockSpec((NUM_CLASSES, TK), lambda k: (0, k)),
            pl.BlockSpec((1, NUM_CLASSES), lambda k: (0, 0)),
        ],
        out_specs=pl.BlockSpec((B, NUM_CLASSES), lambda k: (0, 0)),
        scratch_shapes=[pltpu.VMEM((B, NUM_CLASSES), jnp.float32)],
        compiler_params=pltpu.CompilerParams(
            dimension_semantics=("arbitrary",)),
    )(x_flat, w_t_bf16, bias)


def simple_conv_forward(x_nchw, params):
    scale = params["bn_gamma"] * jax.lax.rsqrt(params["bn_var"] + BN_EPS)
    shift = params["bn_beta"] - params["bn_mean"] * scale

    patches = build_patches(x_nchw)
    w_packed = pack_conv_weights(params["conv_w"], scale, shift)
    y = conv_bn_relu(patches, w_packed)                 # [B, COUT, H*W] channel-major

    # Channel-major flatten == PyTorch x.view(B, -1) on NCHW; contiguous, no transpose.
    y_flat = y.reshape(B, FC_IN)

    # Lane-dense bf16 FC weight: [NUM_CLASSES, FC_IN].
    w_fc_t = jnp.transpose(params["fc_w"], (1, 0)).astype(jnp.bfloat16)
    return fc(y_flat, w_fc_t, params["fc_b"].reshape(1, NUM_CLASSES))


# ---------------------------------------------------------------------------
# Pure-JAX reference (correctness check)
# ---------------------------------------------------------------------------
def reference_forward(x_nchw, params):
    x_nhwc = jnp.transpose(x_nchw, (0, 2, 3, 1))
    y = jax.lax.conv_general_dilated(
        x_nhwc, params["conv_w"], window_strides=(1, 1),
        padding=((1, 1), (1, 1)),
        dimension_numbers=("NHWC", "HWIO", "NHWC"),
        precision=jax.lax.Precision.HIGHEST)
    scale = params["bn_gamma"] / jnp.sqrt(params["bn_var"] + BN_EPS)
    shift = params["bn_beta"] - params["bn_mean"] * scale
    y = jnp.maximum(y * scale + shift, 0.0)
    y = jnp.transpose(y, (0, 3, 1, 2)).reshape(B, FC_IN)
    return jnp.dot(y, params["fc_w"],
                   precision=jax.lax.Precision.HIGHEST) + params["fc_b"]


# ---------------------------------------------------------------------------
# Main
# ---------------------------------------------------------------------------
if __name__ == "__main__":
    key = jax.random.PRNGKey(0)
    k_x, k_cw, k_g, k_b, k_m, k_v, k_fw, k_fb = jax.random.split(key, 8)

    x = jax.random.normal(k_x, (B, CIN, H, W), jnp.float32)  # NCHW input

    params = {
        "conv_w": jax.random.normal(k_cw, (KH, KW, CIN, COUT), jnp.float32) * 0.1,
        "bn_gamma": 1.0 + 0.1 * jax.random.normal(k_g, (COUT,), jnp.float32),
        "bn_beta": 0.1 * jax.random.normal(k_b, (COUT,), jnp.float32),
        "bn_mean": 0.1 * jax.random.normal(k_m, (COUT,), jnp.float32),
        "bn_var": jnp.abs(jax.random.normal(k_v, (COUT,), jnp.float32)) + 0.5,
        "fc_w": jax.random.normal(k_fw, (FC_IN, NUM_CLASSES), jnp.float32) * 0.01,
        "fc_b": 0.1 * jax.random.normal(k_fb, (NUM_CLASSES,), jnp.float32),
    }

    out = jax.block_until_ready(simple_conv_forward(x, params))
    ref = jax.block_until_ready(reference_forward(x, params))

    np.testing.assert_allclose(np.asarray(out), np.asarray(ref),
                               rtol=2e-2, atol=2e-2)
    assert out.shape == (B, NUM_CLASSES)
    print("KERNEL_OK")
</pallas_src>

<mosaic_0001>
module attributes {stable_mosaic.version = 11 : i64} {
  func.func @conv_bn_relu_kernel(%arg0: i32, %arg1: memref<1x32x1024xf32, #tpu.memory_space<vmem>>, %arg2: memref<64x32xf32, #tpu.memory_space<vmem>>, %arg3: memref<1x64x1024xf32, #tpu.memory_space<vmem>>) attributes {dimension_semantics = [#tpu.dimension_semantics<parallel>], iteration_bounds = array<i64: 2>, scalar_prefetch = 0 : i64, scratch_operands = 0 : i64, tpu.core_type = #tpu.core_type<tc>, window_params = [{transform_indices = @transform_0, window_bounds = array<i64: 1, 32, 1024>}, {pipeline_mode = #tpu.pipeline_mode<synchronous>, transform_indices = @transform_1, window_bounds = array<i64: 64, 32>}, {transform_indices = @transform_2, window_bounds = array<i64: 1, 64, 1024>}]} {
    %c0 = arith.constant 0 : index
    %c0_0 = arith.constant 0 : index
    %0 = vector.load %arg2[%c0, %c0_0] : memref<64x32xf32, #tpu.memory_space<vmem>>, vector<64x32xf32>
    %c0_1 = arith.constant 0 : index
    %c0_2 = arith.constant 0 : index
    %c0_3 = arith.constant 0 : index
    %1 = vector.load %arg1[%c0_1, %c0_2, %c0_3] : memref<1x32x1024xf32, #tpu.memory_space<vmem>>, vector<1x32x1024xf32>
    %2 = vector.shape_cast %1 : vector<1x32x1024xf32> to vector<32x1024xf32>
    %cst = arith.constant dense<0.000000e+00> : vector<64x1024xf32>
    %3 = tpu.matmul %0, %2, %cst {dimension_numbers = #tpu.dot_dimension_numbers<[1], [0], [0], [1], [0, 0, 1, 1], [], []>} : vector<64x32xf32>, vector<32x1024xf32>, vector<64x1024xf32> -> vector<64x1024xf32>
    %cst_4 = arith.constant 0.000000e+00 : f32
    %4 = vector.broadcast %cst_4 : f32 to vector<64x1024xf32>
    %5 = arith.maximumf %3, %4 : vector<64x1024xf32>
    %c0_5 = arith.constant 0 : index
    %c0_6 = arith.constant 0 : index
    %c0_7 = arith.constant 0 : index
    %6 = vector.load %arg3[%c0_5, %c0_6, %c0_7] : memref<1x64x1024xf32, #tpu.memory_space<vmem>>, vector<1x64x1024xf32>
    %7 = vector.shape_cast %6 : vector<1x64x1024xf32> to vector<64x1024xf32>
    %8 = vector.shape_cast %5 : vector<64x1024xf32> to vector<1x64x1024xf32>
    tpu.vector_store %arg3[%c0_5, %c0_6, %c0_7], %8 {strides = array<i32>} : memref<1x64x1024xf32, #tpu.memory_space<vmem>>, vector<1x64x1024xf32>,
    return
  }
  func.func @transform_0(%arg0: i32) -> (i32, i32, i32) {
    %c0_i32 = arith.constant 0 : i32
    %c0_i32_0 = arith.constant 0 : i32
    %c0_i32_1 = arith.constant 0 : i32
    return %arg0, %c0_i32, %c0_i32_0 : i32, i32, i32
  }
  func.func @transform_1(%arg0: i32) -> (i32, i32) {
    %c0_i32 = arith.constant 0 : i32
    %c0_i32_0 = arith.constant 0 : i32
    %c0_i32_1 = arith.constant 0 : i32
    return %c0_i32, %c0_i32_0 : i32, i32
  }
  func.func @transform_2(%arg0: i32) -> (i32, i32, i32) {
    %c0_i32 = arith.constant 0 : i32
    %c0_i32_0 = arith.constant 0 : i32
    %c0_i32_1 = arith.constant 0 : i32
    return %arg0, %c0_i32, %c0_i32_0 : i32, i32, i32
  }
}

</mosaic_0001>

<llo_original>
// kernel: tpu_custom_call.1
$region0: #{tpu_custom_call.1}
  #allocation0 [shape = 'u32[]', space=smem, size = 0x4, offset = 0x4, fixed_abs, tag = 'smem constant byte address 0x4 - core index']
  #allocation1 [shape = 'u32[72,128]{1,0:T(1,128)}', space=vmem, size = 0x9000, scoped, tag = 'internal scratch']
  %s0 = inlined_call_operand.hbm [shape: f32[2,32,1024], index: 0, kind: input, shape index: {}]
  %s1 = inlined_call_operand.vmem [shape: f32[64,32], index: 1, kind: input, shape index: {}]
  %s2 = inlined_call_operand.hbm [shape: f32[2,64,1024], index: 2, kind: output, shape index: {}]
  %s3 = sld [smem:[#allocation0]]
  $region45: #{tpu_custom_call.1} parent=0
    _
  %s5 = ssub.s32 1, %s3
  %s6 = scalar_select 0, %s5, %s3
  $region1: #{tpu_custom_call.1} parent=0
    #allocation2 [shape = 'u8[262144]{0}', space=vmem, size = 0x40000, scoped, tag = 'input window, operand 0']
    #allocation3 [shape = 's32[2]{0}', space=sflag, size = 0x8, scoped, tag = 'scoped memory for tpu_custom_call.1']
    #allocation4 [shape = 's32[2]{0}', space=sflag, size = 0x8, scoped, tag = 'scoped memory for tpu_custom_call.1']
    #allocation5 [shape = 'u8[524288]{0}', space=vmem, size = 0x80000, scoped, tag = 'output window, operand 0']
    %7 = vsyncpa [#allocation3], 0
    %s8 = scalar_lea.sflag [#allocation3], 1
    %9 = vsyncpa %s8, 0
    %10 = vsyncpa [#allocation4], 0
    %s11 = scalar_lea.sflag [#allocation4], 1
    %12 = vsyncpa %s11, 0
    loop: start=0, step=1, limit=4
    $region2: #{tpu_custom_call.1} parent=1 // loop_pre_header
      _
    $region3: #{tpu_custom_call.1} parent=1 // loop_header
      %s14 = sphi 0, %s18
      %p15 = scmp.ge.s32.totalorder %s14, 4
      %s24 = sphi 0, %s26
      %s27 = sphi 0, %s24
      %s28 = sphi 0, %s27
      %s44 = sphi 0, %s28
      %s48 = sphi 0, %s48
      %s50 = sphi 0, %s48
      %s51 = sphi 0, %s50
      %s65 = sphi 0, %s51
      %s71 = sphi 0, %s73
      %s74 = sphi 0, %s71
      %s75 = sphi 0, %s74
      %s91 = sphi 0, %s75
    $region4: #{tpu_custom_call.1} parent=1 // loop_header_branch
      %17 = sbr.rel (%p15) target = $region8
    $region5: #{tpu_custom_call.1} parent=1 // loop_body
      %s19 = ssub.s32 %s14, 1
      %s20 = ssub.s32 %s14, 2
      %s21 = sadd.s32 %s14, 1
      %s22 = ssub.s32 %s14, %s21
      %p23 = scmp.eq.s32.totalorder %s22, 0
      %s25 = sadd.s32 %s24, 1
      %s26 = scalar_select %p23, %s24, %s25
      %p29 = pneg %p23
      %p30 = scmp.eq.s32.totalorder %s14, 1
      %p31 = por %p29, %p30
      %p32 = scmp.ne.s32.totalorder %s24, %s27
      %p33 = scmp.eq.s32.totalorder %s14, 0
      %p34 = por %p32, %p33
      %p35 = scmp.ne.s32.totalorder %s24, %s27
      %p36 = scmp.eq.s32.totalorder %s19, 1
      %p37 = por %p35, %p36
      %p38 = scmp.ne.s32.totalorder %s27, %s28
      %p39 = scmp.eq.s32.totalorder %s19, 0
      %p40 = por %p38, %p39
      %p41 = scmp.ne.s32.totalorder %s27, %s28
      %p42 = scmp.eq.s32.totalorder %s20, 1
      %p43 = por %p41, %p42
      %p45 = scmp.ne.s32.totalorder %s28, %s44
      %p46 = scmp.eq.s32.totalorder %s20, 0
      %p47 = por %p45, %p46
      %s49 = sadd.s32 %s48, 1
      %p52 = scmp.eq.s32.totalorder %s14, 1
      %p53 = scmp.ne.s32.totalorder %s48, %s50
      %p54 = scmp.eq.s32.totalorder %s14, 0
      %p55 = por %p53, %p54
      %p56 = scmp.ne.s32.totalorder %s48, %s50
      %p57 = scmp.eq.s32.totalorder %s19, 1
      %p58 = por %p56, %p57
      %p59 = scmp.ne.s32.totalorder %s50, %s51
      %p60 = scmp.eq.s32.totalorder %s19, 0
      %p61 = por %p59, %p60
      %p62 = scmp.ne.s32.totalorder %s50, %s51
      %p63 = scmp.eq.s32.totalorder %s20, 1
      %p64 = por %p62, %p63
      %p66 = scmp.ne.s32.totalorder %s51, %s65
      %p67 = scmp.eq.s32.totalorder %s20, 0
      %p68 = por %p66, %p67
      %s69 = ssub.s32 %s14, %s21
      %p70 = scmp.eq.s32.totalorder %s69, 0
      %s72 = sadd.s32 %s71, 1
      %s73 = scalar_select %p70, %s71, %s72
      %p76 = pneg %p70
      %p77 = scmp.eq.s32.totalorder %s14, 1
      %p78 = por %p76, %p77
      %p79 = scmp.ne.s32.totalorder %s71, %s74
      %p80 = scmp.eq.s32.totalorder %s14, 0
      %p81 = por %p79, %p80
      %p82 = scmp.ne.s32.totalorder %s71, %s74
      %p83 = scmp.eq.s32.totalorder %s19, 1
      %p84 = por %p82, %p83
      %p85 = scmp.ne.s32.totalorder %s74, %s75
      %p86 = scmp.eq.s32.totalorder %s19, 0
      %p87 = por %p85, %p86
      %p88 = scmp.ne.s32.totalorder %s74, %s75
      %p89 = scmp.eq.s32.totalorder %s20, 1
      %p90 = por %p88, %p89
      %p92 = scmp.ne.s32.totalorder %s75, %s91
      %p93 = scmp.eq.s32.totalorder %s20, 0
      %p94 = por %p92, %p93
      %p95 = scmp.le.s32.totalorder 1, %s14
      %p96 = scmp.lt.s32.totalorder %s14, 3
      %p97 = pnand %p95, %p96
      %p98 = pneg %p97
      // Predicated region
      $region9: #{tpu_custom_call.1} parent=5 // pred_check
        _
      $region10: #{tpu_custom_call.1} parent=5 // pred_check_branch
        %100 = sbr.rel (%p97) target = $region12
      $region11: #{tpu_custom_call.1} parent=5 // pred_region
        %s101 = ssub.s32 %s14, 1
        // Predicated region
        $region13: #{tpu_custom_call.1} parent=11 // pred_check
          %p102 = pneg %p61
        $region14: #{tpu_custom_call.1} parent=11 // pred_check_branch
          %104 = sbr.rel (%p102) target = $region16
        $region15: #{tpu_custom_call.1} parent=11 // pred_region
          _
        $region16: #{tpu_custom_call.1} parent=11 // pred_fallthru
          _
      $region12: #{tpu_custom_call.1} parent=5 // pred_fallthru
        _
      %p105 = scmp.lt.s32.totalorder %s14, 2
      // Predicated region
      $region17: #{tpu_custom_call.1} parent=5 // pred_check
        %p106 = pneg %p105
      $region18: #{tpu_custom_call.1} parent=5 // pred_check_branch
        %108 = sbr.rel (%p106) target = $region20
      $region19: #{tpu_custom_call.1} parent=5 // pred_region
        // Predicated region
        $region21: #{tpu_custom_call.1} parent=19 // pred_check
          %p109 = pneg %p34
        $region22: #{tpu_custom_call.1} parent=19 // pred_check_branch
          %111 = sbr.rel (%p109) target = $region24
        $region23: #{tpu_custom_call.1} parent=19 // pred_region
          %s112 = sand.u32 %s24, 1
          %s113 = scalar_lea.sflag [#allocation3], %s112
          %s114 = sand.u32 %s24, 1
          %s115 = smul.addr %s114, 256
          %s116 = scalar_lea.vmem [#allocation2], %s115
          %118 = vsyncadd %s113, 0
          %s119 = smul.addr %s14, 32
          %s120 = smul.addr %s119, 8
          %s121 = scalar_lea.hbm %s0, %s120
          %s122 = sshll.u32 %s121, 4
          %s123 = int_to_ptr.hbm [resolvable:$true] %s122
          %s124 = sshll.u32 %s116, 4
          %s125 = int_to_ptr.vmem [resolvable:$true] %s124
          %130 = dma.hbm_to_vmem [thread:$0]  %s123, 4096, %s125, %s113, 1024, 1024, 64
        $region24: #{tpu_custom_call.1} parent=19 // pred_fallthru
          _
      $region20: #{tpu_custom_call.1} parent=5 // pred_fallthru
        _
      %p131 = scmp.le.s32.totalorder 1, %s14
      %p132 = scmp.lt.s32.totalorder %s14, 3
      %p133 = pnand %p131, %p132
      %p134 = pneg %p133
      // Predicated region
      $region25: #{tpu_custom_call.1} parent=5 // pred_check
        _
      $region26: #{tpu_custom_call.1} parent=5 // pred_check_branch
        %136 = sbr.rel (%p133) target = $region28
      $region27: #{tpu_custom_call.1} parent=5 // pred_region
        %s137 = ssub.s32 %s14, 1
        %s138 = sand.u32 %s27, 1
        %s139 = scalar_lea.sflag [#allocation3], %s138
        %s140 = sand.u32 %s27, 1
        %s141 = smul.addr %s140, 256
        %s142 = scalar_lea.vmem [#allocation2], %s141
        // Predicated region
        $region29: #{tpu_custom_call.1} parent=27 // pred_check
          %p143 = pneg %p40
        $region30: #{tpu_custom_call.1} parent=27 // pred_check_branch
          %145 = sbr.rel (%p143) target = $region32
        $region31: #{tpu_custom_call.1} parent=27 // pred_region
          %147 = dma.done %s139, 4096
        $region32: #{tpu_custom_call.1} parent=27 // pred_fallthru
          _
        %s148 = sand.u32 %s27, 1
        %s149 = scalar_lea.sflag [#allocation3], %s148
        %s150 = sand.u32 %s27, 1
        %s151 = smul.addr %s150, 256
        %s152 = scalar_lea.vmem [#allocation2], %s151
        %p153 = pneg %p40
        %p154 = pneg %p37
        %p155 = pneg %p61
        %p156 = pneg %p58
        %p157 = pneg %p87
        %p158 = pneg %p84
        %s159 = sand.u32 %s74, 1
        %s160 = scalar_lea.sflag [#allocation4], %s159
        %s161 = sand.u32 %s74, 1
        %s162 = smul.addr %s161, 512
        %s163 = scalar_lea.vmem [#allocation5], %s162
        %v164 = vld [vmem:[%s1] sm:$0xff]
        %v165 = vld [vmem:[%s1 + $0x8] sm:$0xff]
        %v166 = vld [vmem:[%s1 + $0x10] sm:$0xff]
        %v167 = vld [vmem:[%s1 + $0x18] sm:$0xff]
        %v168 = vld [vmem:[%s1 + $0x20] sm:$0xff]
        %v169 = vld [vmem:[%s1 + $0x28] sm:$0xff]
        %v170 = vld [vmem:[%s1 + $0x30] sm:$0xff]
        %v171 = vld [vmem:[%s1 + $0x38] sm:$0xff]
        %v172 = vld [vmem:[%s142] sm:$0xff]
        %v173 = vld [vmem:[%s142 + $0x8] sm:$0xff]
        %v174 = vld [vmem:[%s142 + $0x10] sm:$0xff]
        %v175 = vld [vmem:[%s142 + $0x18] sm:$0xff]
        %v176 = vld [vmem:[%s142 + $0x20] sm:$0xff]
        %v177 = vld [vmem:[%s142 + $0x28] sm:$0xff]
        %v178 = vld [vmem:[%s142 + $0x30] sm:$0xff]
        %v179 = vld [vmem:[%s142 + $0x38] sm:$0xff]
        %v180 = vld [vmem:[%s142 + $0x40] sm:$0xff]
        %v181 = vld [vmem:[%s142 + $0x48] sm:$0xff]
        %v182 = vld [vmem:[%s142 + $0x50] sm:$0xff]
        %v183 = vld [vmem:[%s142 + $0x58] sm:$0xff]
        %v184 = vld [vmem:[%s142 + $0x60] sm:$0xff]
        %v185 = vld [vmem:[%s142 + $0x68] sm:$0xff]
        %v186 = vld [vmem:[%s142 + $0x70] sm:$0xff]
        %v187 = vld [vmem:[%s142 + $0x78] sm:$0xff]
        %v188 = vld [vmem:[%s142 + $0x80] sm:$0xff]
        %v189 = vld [vmem:[%s142 + $0x88] sm:$0xff]
        %v190 = vld [vmem:[%s142 + $0x90] sm:$0xff]
        %v191 = vld [vmem:[%s142 + $0x98] sm:$0xff]
        %v192 = vld [vmem:[%s142 + $0xa0] sm:$0xff]
        %v193 = vld [vmem:[%s142 + $0xa8] sm:$0xff]
        %v194 = vld [vmem:[%s142 + $0xb0] sm:$0xff]
        %v195 = vld [vmem:[%s142 + $0xb8] sm:$0xff]
        %v196 = vld [vmem:[%s142 + $0xc0] sm:$0xff]
        %v197 = vld [vmem:[%s142 + $0xc8] sm:$0xff]
        %v198 = vld [vmem:[%s142 + $0xd0] sm:$0xff]
        %v199 = vld [vmem:[%s142 + $0xd8] sm:$0xff]
        %v200 = vld [vmem:[%s142 + $0xe0] sm:$0xff]
        %v201 = vld [vmem:[%s142 + $0xe8] sm:$0xff]
        %v202 = vld [vmem:[%s142 + $0xf0] sm:$0xff]
        %v203 = vld [vmem:[%s142 + $0xf8] sm:$0xff]
        %vm204 = vcmask 261120
        %v206 = vsel %vm204, %v164, 0
        %v209 = vsel %vm204, %v165, 0
        %v212 = vsel %vm204, %v166, 0
        %v215 = vsel %vm204, %v167, 0
        %v218 = vsel %vm204, %v168, 0
        %v221 = vsel %vm204, %v169, 0
        %v224 = vsel %vm204, %v170, 0
        %v227 = vsel %vm204, %v171, 0
        %229 = vmatpush.msra.mxu0 0.0
        %230 = vmatpush.msra.mxu0 0.0
        %231 = vmatpush.msra.mxu0 0.0
        %232 = vmatpush.msra.mxu0 0.0
        %233 = vmatpush.msra.mxu0 0.0
        %234 = vmatpush.msra.mxu0 0.0
        %235 = vmatpush.msra.mxu0 0.0
        %236 = vmatpush.msra.mxu0 0.0
        %237 = vmatpush.msra.mxu0 0.0
        %238 = vmatpush.msra.mxu0 0.0
        %239 = vmatpush.msra.mxu0 0.0
        %240 = vmatpush.msra.mxu0 0.0
        %241 = vmatpush.msra.mxu0 %v196
        %242 = vmatpush.msra.mxu0 %v188
        %243 = vmatpush.msra.mxu0 %v180
        %244 = vmatpush.msra.mxu0 %v172
        %245 = vmatmul.f32.gmra.mxu0 %v206
        %v246 = vpop.f32.mrf.mxu0
        %v247 = vadd.f32 0.0, %v246
        %248 = vmatmul.f32.gmra.mxu0 %v209
        %v249 = vpop.f32.mrf.mxu0
        %v250 = vadd.f32 0.0, %v249
        %251 = vmatmul.f32.gmra.mxu0 %v212
        %v252 = vpop.f32.mrf.mxu0
        %v253 = vadd.f32 0.0, %v252
        %254 = vmatmul.f32.gmra.mxu0 %v215
        %v255 = vpop.f32.mrf.mxu0
        %v256 = vadd.f32 0.0, %v255
        %257 = vmatmul.f32.gmra.mxu0 %v218
        %v258 = vpop.f32.mrf.mxu0
        %v259 = vadd.f32 0.0, %v258
        %260 = vmatmul.f32.gmra.mxu0 %v221
        %v261 = vpop.f32.mrf.mxu0
        %v262 = vadd.f32 0.0, %v261
        %263 = vmatmul.f32.gmra.mxu0 %v224
        %v264 = vpop.f32.mrf.mxu0
        %v265 = vadd.f32 0.0, %v264
        %266 = vmatmul.f32.gmra.mxu0 %v227
        %v267 = vpop.f32.mrf.mxu0
        %v268 = vadd.f32 0.0, %v267
        %269 = vdwg.mxu0
        %270 = vmatpush.msra.mxu0 0.0
        %271 = vmatpush.msra.mxu0 0.0
        %272 = vmatpush.msra.mxu0 0.0
        %273 = vmatpush.msra.mxu0 0.0
        %274 = vmatpush.msra.mxu0 0.0
        %275 = vmatpush.msra.mxu0 0.0
        %276 = vmatpush.msra.mxu0 0.0
        %277 = vmatpush.msra.mxu0 0.0
        %278 = vmatpush.msra.mxu0 0.0
        %279 = vmatpush.msra.mxu0 0.0
        %280 = vmatpush.msra.mxu0 0.0
        %281 = vmatpush.msra.mxu0 0.0
        %282 = vmatpush.msra.mxu0 %v197
        %283 = vmatpush.msra.mxu0 %v189
        %284 = vmatpush.msra.mxu0 %v181
        %285 = vmatpush.msra.mxu0 %v173
        %286 = vmatmul.f32.gmra.mxu0 %v206
        %v287 = vpop.f32.mrf.mxu0
        %v288 = vadd.f32 0.0, %v287
        %289 = vmatmul.f32.gmra.mxu0 %v209
        %v290 = vpop.f32.mrf.mxu0
        %v291 = vadd.f32 0.0, %v290
        %292 = vmatmul.f32.gmra.mxu0 %v212
        %v293 = vpop.f32.mrf.mxu0
        %v294 = vadd.f32 0.0, %v293
        %295 = vmatmul.f32.gmra.mxu0 %v215
        %v296 = vpop.f32.mrf.mxu0
        %v297 = vadd.f32 0.0, %v296
        %298 = vmatmul.f32.gmra.mxu0 %v218
        %v299 = vpop.f32.mrf.mxu0
        %v300 = vadd.f32 0.0, %v299
        %301 = vmatmul.f32.gmra.mxu0 %v221
        %v302 = vpop.f32.mrf.mxu0
        %v303 = vadd.f32 0.0, %v302
        %304 = vmatmul.f32.gmra.mxu0 %v224
        %v305 = vpop.f32.mrf.mxu0
        %v306 = vadd.f32 0.0, %v305
        %307 = vmatmul.f32.gmra.mxu0 %v227
        %v308 = vpop.f32.mrf.mxu0
        %v309 = vadd.f32 0.0, %v308
        %310 = vdwg.mxu0
        %311 = vmatpush.msra.mxu0 0.0
        %312 = vmatpush.msra.mxu0 0.0
        %313 = vmatpush.msra.mxu0 0.0
        %314 = vmatpush.msra.mxu0 0.0
        %315 = vmatpush.msra.mxu0 0.0
        %316 = vmatpush.msra.mxu0 0.0
        %317 = vmatpush.msra.mxu0 0.0
        %318 = vmatpush.msra.mxu0 0.0
        %319 = vmatpush.msra.mxu0 0.0
        %320 = vmatpush.msra.mxu0 0.0
        %321 = vmatpush.msra.mxu0 0.0
        %322 = vmatpush.msra.mxu0 0.0
        %323 = vmatpush.msra.mxu0 %v198
        %324 = vmatpush.msra.mxu0 %v190
        %325 = vmatpush.msra.mxu0 %v182
        %326 = vmatpush.msra.mxu0 %v174
        %327 = vmatmul.f32.gmra.mxu0 %v206
        %v328 = vpop.f32.mrf.mxu0
        %v329 = vadd.f32 0.0, %v328
        %330 = vmatmul.f32.gmra.mxu0 %v209
        %v331 = vpop.f32.mrf.mxu0
        %v332 = vadd.f32 0.0, %v331
        %333 = vmatmul.f32.gmra.mxu0 %v212
        %v334 = vpop.f32.mrf.mxu0
        %v335 = vadd.f32 0.0, %v334
        %336 = vmatmul.f32.gmra.mxu0 %v215
        %v337 = vpop.f32.mrf.mxu0
        %v338 = vadd.f32 0.0, %v337
        %339 = vmatmul.f32.gmra.mxu0 %v218
        %v340 = vpop.f32.mrf.mxu0
        %v341 = vadd.f32 0.0, %v340
        %342 = vmatmul.f32.gmra.mxu0 %v221
        %v343 = vpop.f32.mrf.mxu0
        %v344 = vadd.f32 0.0, %v343
        %345 = vmatmul.f32.gmra.mxu0 %v224
        %v346 = vpop.f32.mrf.mxu0
        %v347 = vadd.f32 0.0, %v346
        %348 = vmatmul.f32.gmra.mxu0 %v227
        %v349 = vpop.f32.mrf.mxu0
        %v350 = vadd.f32 0.0, %v349
        %351 = vdwg.mxu0
        %352 = vmatpush.msra.mxu0 0.0
        %353 = vmatpush.msra.mxu0 0.0
        %354 = vmatpush.msra.mxu0 0.0
        %355 = vmatpush.msra.mxu0 0.0
        %356 = vmatpush.msra.mxu0 0.0
        %357 = vmatpush.msra.mxu0 0.0
        %358 = vmatpush.msra.mxu0 0.0
        %359 = vmatpush.msra.mxu0 0.0
        %360 = vmatpush.msra.mxu0 0.0
        %361 = vmatpush.msra.mxu0 0.0
        %362 = vmatpush.msra.mxu0 0.0
        %363 = vmatpush.msra.mxu0 0.0
        %364 = vmatpush.msra.mxu0 %v199
        %365 = vmatpush.msra.mxu0 %v191
        %366 = vmatpush.msra.mxu0 %v183
        %367 = vmatpush.msra.mxu0 %v175
        %368 = vmatmul.f32.gmra.mxu0 %v206
        %v369 = vpop.f32.mrf.mxu0
        %v370 = vadd.f32 0.0, %v369
        %371 = vmatmul.f32.gmra.mxu0 %v209
        %v372 = vpop.f32.mrf.mxu0
        %v373 = vadd.f32 0.0, %v372
        %374 = vmatmul.f32.gmra.mxu0 %v212
        %v375 = vpop.f32.mrf.mxu0
        %v376 = vadd.f32 0.0, %v375
        %377 = vmatmul.f32.gmra.mxu0 %v215
        %v378 = vpop.f32.mrf.mxu0
        %v379 = vadd.f32 0.0, %v378
        %380 = vmatmul.f32.gmra.mxu0 %v218
        %v381 = vpop.f32.mrf.mxu0
        %v382 = vadd.f32 0.0, %v381
        %383 = vmatmul.f32.gmra.mxu0 %v221
        %v384 = vpop.f32.mrf.mxu0
        %v385 = vadd.f32 0.0, %v384
        %386 = vmatmul.f32.gmra.mxu0 %v224
        %v387 = vpop.f32.mrf.mxu0
        %v388 = vadd.f32 0.0, %v387
        %389 = vmatmul.f32.gmra.mxu0 %v227
        %v390 = vpop.f32.mrf.mxu0
        %v391 = vadd.f32 0.0, %v390
        %392 = vdwg.mxu0
        %393 = vmatpush.msra.mxu0 0.0
        %394 = vmatpush.msra.mxu0 0.0
        %395 = vmatpush.msra.mxu0 0.0
        %396 = vmatpush.msra.mxu0 0.0
        %397 = vmatpush.msra.mxu0 0.0
        %398 = vmatpush.msra.mxu0 0.0
        %399 = vmatpush.msra.mxu0 0.0
        %400 = vmatpush.msra.mxu0 0.0
        %401 = vmatpush.msra.mxu0 0.0
        %402 = vmatpush.msra.mxu0 0.0
        %403 = vmatpush.msra.mxu0 0.0
        %404 = vmatpush.msra.mxu0 0.0
        %405 = vmatpush.msra.mxu0 %v200
        %406 = vmatpush.msra.mxu0 %v192
        %407 = vmatpush.msra.mxu0 %v184
        %408 = vmatpush.msra.mxu0 %v176
        %409 = vmatmul.f32.gmra.mxu0 %v206
        %v410 = vpop.f32.mrf.mxu0
        %v411 = vadd.f32 0.0, %v410
        %412 = vmatmul.f32.gmra.mxu0 %v209
        %v413 = vpop.f32.mrf.mxu0
        %v414 = vadd.f32 0.0, %v413
        %415 = vmatmul.f32.gmra.mxu0 %v212
        %v416 = vpop.f32.mrf.mxu0
        %v417 = vadd.f32 0.0, %v416
        %418 = vmatmul.f32.gmra.mxu0 %v215
        %v419 = vpop.f32.mrf.mxu0
        %v420 = vadd.f32 0.0, %v419
        %421 = vmatmul.f32.gmra.mxu0 %v218
        %v422 = vpop.f32.mrf.mxu0
        %v423 = vadd.f32 0.0, %v422
        %424 = vmatmul.f32.gmra.mxu0 %v221
        %v425 = vpop.f32.mrf.mxu0
        %v426 = vadd.f32 0.0, %v425
        %427 = vmatmul.f32.gmra.mxu0 %v224
        %v428 = vpop.f32.mrf.mxu0
        %v429 = vadd.f32 0.0, %v428
        %430 = vmatmul.f32.gmra.mxu0 %v227
        %v431 = vpop.f32.mrf.mxu0
        %v432 = vadd.f32 0.0, %v431
        %433 = vdwg.mxu0
        %434 = vmatpush.msra.mxu0 0.0
        %435 = vmatpush.msra.mxu0 0.0
        %436 = vmatpush.msra.mxu0 0.0
        %437 = vmatpush.msra.mxu0 0.0
        %438 = vmatpush.msra.mxu0 0.0
        %439 = vmatpush.msra.mxu0 0.0
        %440 = vmatpush.msra.mxu0 0.0
        %441 = vmatpush.msra.mxu0 0.0
        %442 = vmatpush.msra.mxu0 0.0
        %443 = vmatpush.msra.mxu0 0.0
        %444 = vmatpush.msra.mxu0 0.0
        %445 = vmatpush.msra.mxu0 0.0
        %446 = vmatpush.msra.mxu0 %v201
        %447 = vmatpush.msra.mxu0 %v193
        %448 = vmatpush.msra.mxu0 %v185
        %449 = vmatpush.msra.mxu0 %v177
        %450 = vmatmul.f32.gmra.mxu0 %v206
        %v451 = vpop.f32.mrf.mxu0
        %v452 = vadd.f32 0.0, %v451
        %453 = vmatmul.f32.gmra.mxu0 %v209
        %v454 = vpop.f32.mrf.mxu0
        %v455 = vadd.f32 0.0, %v454
        %456 = vmatmul.f32.gmra.mxu0 %v212
        %v457 = vpop.f32.mrf.mxu0
        %v458 = vadd.f32 0.0, %v457
        %459 = vmatmul.f32.gmra.mxu0 %v215
        %v460 = vpop.f32.mrf.mxu0
        %v461 = vadd.f32 0.0, %v460
        %462 = vmatmul.f32.gmra.mxu0 %v218
        %v463 = vpop.f32.mrf.mxu0
        %v464 = vadd.f32 0.0, %v463
        %465 = vmatmul.f32.gmra.mxu0 %v221
        %v466 = vpop.f32.mrf.mxu0
        %v467 = vadd.f32 0.0, %v466
        %468 = vmatmul.f32.gmra.mxu0 %v224
        %v469 = vpop.f32.mrf.mxu0
        %v470 = vadd.f32 0.0, %v469
        %471 = vmatmul.f32.gmra.mxu0 %v227
        %v472 = vpop.f32.mrf.mxu0
        %v473 = vadd.f32 0.0, %v472
        %474 = vdwg.mxu0
        %475 = vmatpush.msra.mxu0 0.0
        %476 = vmatpush.msra.mxu0 0.0
        %477 = vmatpush.msra.mxu0 0.0
        %478 = vmatpush.msra.mxu0 0.0
        %479 = vmatpush.msra.mxu0 0.0
        %480 = vmatpush.msra.mxu0 0.0
        %481 = vmatpush.msra.mxu0 0.0
        %482 = vmatpush.msra.mxu0 0.0
        %483 = vmatpush.msra.mxu0 0.0
        %484 = vmatpush.msra.mxu0 0.0
        %485 = vmatpush.msra.mxu0 0.0
        %486 = vmatpush.msra.mxu0 0.0
        %487 = vmatpush.msra.mxu0 %v202
        %488 = vmatpush.msra.mxu0 %v194
        %489 = vmatpush.msra.mxu0 %v186
        %490 = vmatpush.msra.mxu0 %v178
        %491 = vmatmul.f32.gmra.mxu0 %v206
        %v492 = vpop.f32.mrf.mxu0
        %v493 = vadd.f32 0.0, %v492
        %494 = vmatmul.f32.gmra.mxu0 %v209
        %v495 = vpop.f32.mrf.mxu0
        %v496 = vadd.f32 0.0, %v495
        %497 = vmatmul.f32.gmra.mxu0 %v212
        %v498 = vpop.f32.mrf.mxu0
        %v499 = vadd.f32 0.0, %v498
        %500 = vmatmul.f32.gmra.mxu0 %v215
        %v501 = vpop.f32.mrf.mxu0
        %v502 = vadd.f32 0.0, %v501
        %503 = vmatmul.f32.gmra.mxu0 %v218
        %v504 = vpop.f32.mrf.mxu0
        %v505 = vadd.f32 0.0, %v504
        %506 = vmatmul.f32.gmra.mxu0 %v221
        %v507 = vpop.f32.mrf.mxu0
        %v508 = vadd.f32 0.0, %v507
        %509 = vmatmul.f32.gmra.mxu0 %v224
        %v510 = vpop.f32.mrf.mxu0
        %v511 = vadd.f32 0.0, %v510
        %512 = vmatmul.f32.gmra.mxu0 %v227
        %v513 = vpop.f32.mrf.mxu0
        %v514 = vadd.f32 0.0, %v513
        %515 = vdwg.mxu0
        %516 = vmatpush.msra.mxu0 0.0
        %517 = vmatpush.msra.mxu0 0.0
        %518 = vmatpush.msra.mxu0 0.0
        %519 = vmatpush.msra.mxu0 0.0
        %520 = vmatpush.msra.mxu0 0.0
        %521 = vmatpush.msra.mxu0 0.0
        %522 = vmatpush.msra.mxu0 0.0
        %523 = vmatpush.msra.mxu0 0.0
        %524 = vmatpush.msra.mxu0 0.0
        %525 = vmatpush.msra.mxu0 0.0
        %526 = vmatpush.msra.mxu0 0.0
        %527 = vmatpush.msra.mxu0 0.0
        %528 = vmatpush.msra.mxu0 %v203
        %529 = vmatpush.msra.mxu0 %v195
        %530 = vmatpush.msra.mxu0 %v187
        %531 = vmatpush.msra.mxu0 %v179
        %532 = vmatmul.f32.gmra.mxu0 %v206
        %v533 = vpop.f32.mrf.mxu0
        %v534 = vadd.f32 0.0, %v533
        %535 = vmatmul.f32.gmra.mxu0 %v209
        %v536 = vpop.f32.mrf.mxu0
        %v537 = vadd.f32 0.0, %v536
        %538 = vmatmul.f32.gmra.mxu0 %v212
        %v539 = vpop.f32.mrf.mxu0
        %v540 = vadd.f32 0.0, %v539
        %541 = vmatmul.f32.gmra.mxu0 %v215
        %v542 = vpop.f32.mrf.mxu0
        %v543 = vadd.f32 0.0, %v542
        %544 = vmatmul.f32.gmra.mxu0 %v218
        %v545 = vpop.f32.mrf.mxu0
        %v546 = vadd.f32 0.0, %v545
        %547 = vmatmul.f32.gmra.mxu0 %v221
        %v548 = vpop.f32.mrf.mxu0
        %v549 = vadd.f32 0.0, %v548
        %550 = vmatmul.f32.gmra.mxu0 %v224
        %v551 = vpop.f32.mrf.mxu0
        %v552 = vadd.f32 0.0, %v551
        %553 = vmatmul.f32.gmra.mxu0 %v227
        %v554 = vpop.f32.mrf.mxu0
        %v555 = vadd.f32 0.0, %v554
        %556 = vdwg.mxu0
        %v557 = vmax.f32 %v247, 0.0
        %v558 = vmax.f32 %v288, 0.0
        %v559 = vmax.f32 %v329, 0.0
        %v560 = vmax.f32 %v370, 0.0
        %v561 = vmax.f32 %v411, 0.0
        %v562 = vmax.f32 %v452, 0.0
        %v563 = vmax.f32 %v493, 0.0
        %v564 = vmax.f32 %v534, 0.0
        %v565 = vmax.f32 %v250, 0.0
        %v566 = vmax.f32 %v291, 0.0
        %v567 = vmax.f32 %v332, 0.0
        %v568 = vmax.f32 %v373, 0.0
        %v569 = vmax.f32 %v414, 0.0
        %v570 = vmax.f32 %v455, 0.0
        %v571 = vmax.f32 %v496, 0.0
        %v572 = vmax.f32 %v537, 0.0
        %v573 = vmax.f32 %v253, 0.0
        %v574 = vmax.f32 %v294, 0.0
        %v575 = vmax.f32 %v335, 0.0
        %v576 = vmax.f32 %v376, 0.0
        %v577 = vmax.f32 %v417, 0.0
        %v578 = vmax.f32 %v458, 0.0
        %v579 = vmax.f32 %v499, 0.0
        %v580 = vmax.f32 %v540, 0.0
        %v581 = vmax.f32 %v256, 0.0
        %v582 = vmax.f32 %v297, 0.0
        %v583 = vmax.f32 %v338, 0.0
        %v584 = vmax.f32 %v379, 0.0
        %v585 = vmax.f32 %v420, 0.0
        %v586 = vmax.f32 %v461, 0.0
        %v587 = vmax.f32 %v502, 0.0
        %v588 = vmax.f32 %v543, 0.0
        %v589 = vmax.f32 %v259, 0.0
        %v590 = vmax.f32 %v300, 0.0
        %v591 = vmax.f32 %v341, 0.0
        %v592 = vmax.f32 %v382, 0.0
        %v593 = vmax.f32 %v423, 0.0
        %v594 = vmax.f32 %v464, 0.0
        %v595 = vmax.f32 %v505, 0.0
        %v596 = vmax.f32 %v546, 0.0
        %v597 = vmax.f32 %v262, 0.0
        %v598 = vmax.f32 %v303, 0.0
        %v599 = vmax.f32 %v344, 0.0
        %v600 = vmax.f32 %v385, 0.0
        %v601 = vmax.f32 %v426, 0.0
        %v602 = vmax.f32 %v467, 0.0
        %v603 = vmax.f32 %v508, 0.0
        %v604 = vmax.f32 %v549, 0.0
        %v605 = vmax.f32 %v265, 0.0
        %v606 = vmax.f32 %v306, 0.0
        %v607 = vmax.f32 %v347, 0.0
        %v608 = vmax.f32 %v388, 0.0
        %v609 = vmax.f32 %v429, 0.0
        %v610 = vmax.f32 %v470, 0.0
        %v611 = vmax.f32 %v511, 0.0
        %v612 = vmax.f32 %v552, 0.0
        %v613 = vmax.f32 %v268, 0.0
        %v614 = vmax.f32 %v309, 0.0
        %v615 = vmax.f32 %v350, 0.0
        %v616 = vmax.f32 %v391, 0.0
        %v617 = vmax.f32 %v432, 0.0
        %v618 = vmax.f32 %v473, 0.0
        %v619 = vmax.f32 %v514, 0.0
        %v620 = vmax.f32 %v555, 0.0
        %621 = vst [vmem:[%s163] sm:$0xff] %v557
        %622 = vst [vmem:[%s163 + $0x8] sm:$0xff] %v558
        %623 = vst [vmem:[%s163 + $0x10] sm:$0xff] %v559
        %624 = vst [vmem:[%s163 + $0x18] sm:$0xff] %v560
        %625 = vst [vmem:[%s163 + $0x20] sm:$0xff] %v561
        %626 = vst [vmem:[%s163 + $0x28] sm:$0xff] %v562
        %627 = vst [vmem:[%s163 + $0x30] sm:$0xff] %v563
        %628 = vst [vmem:[%s163 + $0x38] sm:$0xff] %v564
        %629 = vst [vmem:[%s163 + $0x40] sm:$0xff] %v565
        %630 = vst [vmem:[%s163 + $0x48] sm:$0xff] %v566
        %631 = vst [vmem:[%s163 + $0x50] sm:$0xff] %v567
        %632 = vst [vmem:[%s163 + $0x58] sm:$0xff] %v568
        %633 = vst [vmem:[%s163 + $0x60] sm:$0xff] %v569
        %634 = vst [vmem:[%s163 + $0x68] sm:$0xff] %v570
        %635 = vst [vmem:[%s163 + $0x70] sm:$0xff] %v571
        %636 = vst [vmem:[%s163 + $0x78] sm:$0xff] %v572
        %637 = vst [vmem:[%s163 + $0x80] sm:$0xff] %v573
        %638 = vst [vmem:[%s163 + $0x88] sm:$0xff] %v574
        %639 = vst [vmem:[%s163 + $0x90] sm:$0xff] %v575
        %640 = vst [vmem:[%s163 + $0x98] sm:$0xff] %v576
        %641 = vst [vmem:[%s163 + $0xa0] sm:$0xff] %v577
        %642 = vst [vmem:[%s163 + $0xa8] sm:$0xff] %v578
        %643 = vst [vmem:[%s163 + $0xb0] sm:$0xff] %v579
        %644 = vst [vmem:[%s163 + $0xb8] sm:$0xff] %v580
        %645 = vst [vmem:[%s163 + $0xc0] sm:$0xff] %v581
        %646 = vst [vmem:[%s163 + $0xc8] sm:$0xff] %v582
        %647 = vst [vmem:[%s163 + $0xd0] sm:$0xff] %v583
        %648 = vst [vmem:[%s163 + $0xd8] sm:$0xff] %v584
        %649 = vst [vmem:[%s163 + $0xe0] sm:$0xff] %v585
        %650 = vst [vmem:[%s163 + $0xe8] sm:$0xff] %v586
        %651 = vst [vmem:[%s163 + $0xf0] sm:$0xff] %v587
        %652 = vst [vmem:[%s163 + $0xf8] sm:$0xff] %v588
        %653 = vst [vmem:[%s163 + $0x100] sm:$0xff] %v589
        %654 = vst [vmem:[%s163 + $0x108] sm:$0xff] %v590
        %655 = vst [vmem:[%s163 + $0x110] sm:$0xff] %v591
        %656 = vst [vmem:[%s163 + $0x118] sm:$0xff] %v592
        %657 = vst [vmem:[%s163 + $0x120] sm:$0xff] %v593
        %658 = vst [vmem:[%s163 + $0x128] sm:$0xff] %v594
        %659 = vst [vmem:[%s163 + $0x130] sm:$0xff] %v595
        %660 = vst [vmem:[%s163 + $0x138] sm:$0xff] %v596
        %661 = vst [vmem:[%s163 + $0x140] sm:$0xff] %v597
        %662 = vst [vmem:[%s163 + $0x148] sm:$0xff] %v598
        %663 = vst [vmem:[%s163 + $0x150] sm:$0xff] %v599
        %664 = vst [vmem:[%s163 + $0x158] sm:$0xff] %v600
        %665 = vst [vmem:[%s163 + $0x160] sm:$0xff] %v601
        %666 = vst [vmem:[%s163 + $0x168] sm:$0xff] %v602
        %667 = vst [vmem:[%s163 + $0x170] sm:$0xff] %v603
        %668 = vst [vmem:[%s163 + $0x178] sm:$0xff] %v604
        %669 = vst [vmem:[%s163 + $0x180] sm:$0xff] %v605
        %670 = vst [vmem:[%s163 + $0x188] sm:$0xff] %v606
        %671 = vst [vmem:[%s163 + $0x190] sm:$0xff] %v607
        %672 = vst [vmem:[%s163 + $0x198] sm:$0xff] %v608
        %673 = vst [vmem:[%s163 + $0x1a0] sm:$0xff] %v609
        %674 = vst [vmem:[%s163 + $0x1a8] sm:$0xff] %v610
        %675 = vst [vmem:[%s163 + $0x1b0] sm:$0xff] %v611
        %676 = vst [vmem:[%s163 + $0x1b8] sm:$0xff] %v612
        %677 = vst [vmem:[%s163 + $0x1c0] sm:$0xff] %v613
        %678 = vst [vmem:[%s163 + $0x1c8] sm:$0xff] %v614
        %679 = vst [vmem:[%s163 + $0x1d0] sm:$0xff] %v615
        %680 = vst [vmem:[%s163 + $0x1d8] sm:$0xff] %v616
        %681 = vst [vmem:[%s163 + $0x1e0] sm:$0xff] %v617
        %682 = vst [vmem:[%s163 + $0x1e8] sm:$0xff] %v618
        %683 = vst [vmem:[%s163 + $0x1f0] sm:$0xff] %v619
        %684 = vst [vmem:[%s163 + $0x1f8] sm:$0xff] %v620
        %s685 = sand.u32 %s74, 1
        %s686 = scalar_lea.sflag [#allocation4], %s685
        %s687 = sand.u32 %s74, 1
        %s688 = smul.addr %s687, 512
        %s689 = scalar_lea.vmem [#allocation5], %s688
        // Predicated region
        $region33: #{tpu_custom_call.1} parent=27 // pred_check
          %p690 = pneg %p84
        $region34: #{tpu_custom_call.1} parent=27 // pred_check_branch
          %692 = sbr.rel (%p690) target = $region36
        $region35: #{tpu_custom_call.1} parent=27 // pred_region
          %694 = vsyncadd %s686, 0
          %s695 = smul.addr %s19, 64
          %s696 = smul.addr %s695, 8
          %s697 = scalar_lea.hbm %s2, %s696
          %s698 = sshll.u32 %s689, 4
          %s699 = int_to_ptr.vmem [resolvable:$true] %s698
          %s700 = sshll.u32 %s697, 4
          %s701 = int_to_ptr.hbm [resolvable:$true] %s700
          %706 = dma.vmem_to_hbm [thread:$0]  %s699, 8192, %s701, %s686, 1024, 1024, 64
        $region36: #{tpu_custom_call.1} parent=27 // pred_fallthru
          _
      $region28: #{tpu_custom_call.1} parent=5 // pred_fallthru
        _
      %p707 = scmp.le.s32.totalorder 2, %s14
      // Predicated region
      $region37: #{tpu_custom_call.1} parent=5 // pred_check
        %p708 = pneg %p707
      $region38: #{tpu_custom_call.1} parent=5 // pred_check_branch
        %710 = sbr.rel (%p708) target = $region40
      $region39: #{tpu_custom_call.1} parent=5 // pred_region
        %s711 = ssub.s32 %s14, 2
        // Predicated region
        $region41: #{tpu_custom_call.1} parent=39 // pred_check
          %p712 = pneg %p90
        $region42: #{tpu_custom_call.1} parent=39 // pred_check_branch
          %714 = sbr.rel (%p712) target = $region44
        $region43: #{tpu_custom_call.1} parent=39 // pred_region
          %s715 = sand.u32 %s75, 1
          %s716 = scalar_lea.sflag [#allocation4], %s715
          %s717 = sand.u32 %s75, 1
          %s718 = smul.addr %s717, 512
          %s719 = scalar_lea.vmem [#allocation5], %s718
          %721 = dma.done %s716, 8192
        $region44: #{tpu_custom_call.1} parent=39 // pred_fallthru
          _
      $region40: #{tpu_custom_call.1} parent=5 // pred_fallthru
        _
    $region6: #{tpu_custom_call.1} parent=1 // loop_footer
      %s18 = sadd.s32 1, %s14
    $region7: #{tpu_custom_call.1} parent=1 // loop_footer_branch
      %13 = sbr.rel target = $region3
    $region8: #{tpu_custom_call.1} parent=1 // loop_exit
      _
    %722 = vsyncpa [#allocation3], 1
    %s723 = scalar_lea.sflag [#allocation3], 1
    %724 = vsyncpa %s723, 1
    %725 = vsyncpa [#allocation4], 1
    %s726 = scalar_lea.sflag [#allocation4], 1
    %727 = vsyncpa %s726, 1

</llo_original>
